<compile_context>
chip_gen: v7x
topology: tpu7x:2x2x1
jax: 0.10.0
libtpu: 0.0.40
codegen_flags: <defaults>
</compile_context>

<pallas_src>
import functools
import math

import jax
import jax.numpy as jnp
from jax.experimental import pallas as pl
from jax.experimental.pallas import tpu as pltpu

_LANE = 128
_SUBLANE = 8


def _vmem_limit_bytes():
    """Generation-aware scoped-VMEM budget (v5e/v6e: 128 MiB phys, v7x: 64 MiB/TC)."""
    cap = 64 * 1024 * 1024
    try:
        cap = int(pltpu.get_tpu_info().vmem_capacity_bytes)
    except Exception:
        pass
    # ~25% headroom for compiler scratch; never request more than 64 MiB scoped.
    return max(32 * 1024 * 1024, min(cap * 3 // 4, 64 * 1024 * 1024))


def _avg_tiles(B, S, H, itemsize, n_hidden):
    """(TB, TS, vmem_limit) for the masked-average kernels.

    TS is a multiple of 128 (or full S when S <= 128); TB is a multiple of 8
    (or full B when B <= 8).  Shrinks TB first (keeps long contiguous DMA runs
    along S*H), then TS, until one hidden tile fits the per-input budget.
    """
    vmem_limit = _vmem_limit_bytes()
    # ~Half the scoped VMEM for the double-buffered hidden tiles (n_hidden inputs).
    budget = max(512 * 1024, (vmem_limit // 2) // (2 * n_hidden))

    if S <= _LANE:
        TS = S                                       # full extent (any S)
    else:
        TS = (min(S, 4096) // _LANE) * _LANE         # multiple of 128

    if B <= _SUBLANE:
        TB = B                                       # full extent (any B)
    elif B < 2 * _SUBLANE:
        TB = _SUBLANE
    else:
        # >= 2 batch tiles so both v7x TensorCores get work.
        TB = max(_SUBLANE, min(256, ((B // 2) // _SUBLANE) * _SUBLANE))

    def tile_bytes():
        return TB * TS * H * itemsize

    while tile_bytes() > budget and TB > _SUBLANE:
        TB = max(_SUBLANE, ((TB // 2) // _SUBLANE) * _SUBLANE)
    while tile_bytes() > budget and TS > _LANE:
        TS = max(_LANE, ((TS // 2) // _LANE) * _LANE)
    return TB, TS, vmem_limit


# ---------------------------------------------------------------------------
# Kernel 1: CLS pooler  ->  tanh(cls_vec @ W_t + b), tiled over batch.
#   x : [TB, H] tile (CLS slice fused via the [B, S*H] reshape trick)
#   W_t : [H, H] VMEM-resident     b : [1, H] VMEM-resident
# ---------------------------------------------------------------------------
def _cls_kernel(x_ref, w_ref, b_ref, o_ref):
    y = jnp.dot(x_ref[...], w_ref[...], preferred_element_type=jnp.float32)
    y = y + b_ref[...].astype(jnp.float32)
    o_ref[...] = jnp.tanh(y).astype(o_ref.dtype)


def _cls_batch_tile(B):
    if B <= _SUBLANE:
        return B
    if B < 2 * _SUBLANE:
        return _SUBLANE
    # >= 2 tiles for the v7x 2-TC split, capped at 128 (v5e MXU width).
    return max(_SUBLANE, min(128, ((B // 2) // _SUBLANE) * _SUBLANE))


def cls_pooler(hidden_states, w_t, bias2d):
    """tanh(hidden_states[:, 0, :] @ w_t + bias); CLS slice fused into the kernel."""
    B, S, H = hidden_states.shape
    TB = _cls_batch_tile(B)
    if H % _LANE == 0:
        # Contiguous [B,S,H] -> [B,S*H] reshape is free; column-block 0 of width
        # H is exactly the CLS token, so the kernel's DMA performs the slice.
        x_in = hidden_states.reshape(B, S * H)
    else:
        # TODO(synk): when H isn't lane-aligned, fall back to a tiny XLA slice.
        x_in = hidden_states[:, 0, :]
    return pl.pallas_call(
        _cls_kernel,
        out_shape=jax.ShapeDtypeStruct((B, H), hidden_states.dtype),
        grid_spec=pltpu.PrefetchScalarGridSpec(
            num_scalar_prefetch=0,
            grid=(pl.cdiv(B, TB),),
            in_specs=[
                pl.BlockSpec((TB, H), lambda i: (i, 0)),   # CLS tile
                pl.BlockSpec((H, H), lambda i: (0, 0)),    # resident weight
                pl.BlockSpec((1, H), lambda i: (0, 0)),    # resident bias
            ],
            out_specs=pl.BlockSpec((TB, H), lambda i: (i, 0)),
        ),
        compiler_params=pltpu.CompilerParams(
            dimension_semantics=("parallel",),
            vmem_limit_bytes=_vmem_limit_bytes()),
    )(x_in, w_t, bias2d)


# ---------------------------------------------------------------------------
# Kernels 2/3: masked average pooling, tiled (B parallel, S reduction-last).
#   out[b] = scale * inv_den[b] * sum_s(h * mask)        (inv_den precomputed)
# ---------------------------------------------------------------------------
def _seq_valid_mask(seq_len, tile_s, shape2d):
    s = pl.program_id(1)
    valid = jnp.minimum(seq_len - s * tile_s, tile_s)
    col = jax.lax.broadcasted_iota(jnp.int32, shape2d, 1)
    return (col < valid)[:, :, None]


def _masked_sum_f32(h, m3, smask3):
    masked = h * m3                     # native dtype; mask is 0/1 -> exact
    if smask3 is not None:              # zero out the padded tail of a ragged S tile
        masked = jnp.where(smask3, masked, 0)
    return jnp.sum(masked.astype(jnp.float32), axis=1)


def _avg_kernel(h_ref, m_ref, inv_ref, o_ref, num_acc, *,
                seq_len, tile_s, scale, ragged_s):
    s = pl.program_id(1)

    @pl.when(s == 0)
    def _():
        num_acc[...] = jnp.zeros_like(num_acc)

    m = m_ref[...]
    smask3 = _seq_valid_mask(seq_len, tile_s, m.shape) if ragged_s else None
    num_acc[...] += _masked_sum_f32(h_ref[...], m[:, :, None], smask3)

    @pl.when(s == pl.num_programs(1) - 1)
    def _():
        o_ref[...] = (num_acc[...] * (scale * inv_ref[...])).astype(o_ref.dtype)


def _avg2_kernel(ha_ref, hb_ref, m_ref, inv_ref, o_ref, num_acc, *,
                 seq_len, tile_s, scale, ragged_s):
    s = pl.program_id(1)

    @pl.when(s == 0)
    def _():
        num_acc[...] = jnp.zeros_like(num_acc)

    m = m_ref[...]
    smask3 = _seq_valid_mask(seq_len, tile_s, m.shape) if ragged_s else None
    m3 = m[:, :, None]
    num_acc[...] += (_masked_sum_f32(ha_ref[...], m3, smask3)
                     + _masked_sum_f32(hb_ref[...], m3, smask3))

    @pl.when(s == pl.num_programs(1) - 1)
    def _():
        # (a/d + b/d)/2 == (a+b) * (0.5/d): single fused pass, identical math.
        o_ref[...] = (num_acc[...] * (scale * inv_ref[...])).astype(o_ref.dtype)


def _inv_den(attention_mask):
    den = jnp.sum(attention_mask.astype(jnp.float32), axis=1, keepdims=True) + 1e-8
    return 1.0 / den   # [B, 1] f32, trivial XLA reduce over [B, S]


def _avg_call(kernel, hiddens, attention_mask, *, scale, tile_b, tile_s):
    B, S, H = hiddens[0].shape
    dtype = hiddens[0].dtype
    itemsize = dtype.itemsize
    n_hidden = len(hiddens)
    TB, TS, vmem_limit = _avg_tiles(B, S, H, itemsize, n_hidden)
    if tile_b is not None:
        TB = tile_b
    if tile_s is not None:
        TS = tile_s
    ragged_s = (S % TS) != 0

    mask = attention_mask.astype(dtype)        # 0/1 values: exact in bf16 too
    inv_den = _inv_den(attention_mask)

    h_spec = pl.BlockSpec((TB, TS, H), lambda b, s: (b, s, 0))
    kern = functools.partial(kernel, seq_len=S, tile_s=TS,
                             scale=scale, ragged_s=ragged_s)
    bytes_accessed = int((n_hidden * B * S * H + B * S + B * H) * itemsize + 4 * B)
    cost = pl.CostEstimate(flops=2 * n_hidden * B * S * H,
                           transcendentals=0,
                           bytes_accessed=bytes_accessed)
    return pl.pallas_call(
        kern,
        out_shape=jax.ShapeDtypeStruct((B, H), dtype),
        grid_spec=pltpu.PrefetchScalarGridSpec(
            num_scalar_prefetch=0,
            grid=(pl.cdiv(B, TB), pl.cdiv(S, TS)),        # reduction axis (S) last
            in_specs=[h_spec] * n_hidden + [
                pl.BlockSpec((TB, TS), lambda b, s: (b, s)),
                pl.BlockSpec((TB, 1), lambda b, s: (b, 0)),
            ],
            out_specs=pl.BlockSpec((TB, H), lambda b, s: (b, 0)),
            scratch_shapes=[pltpu.VMEM((TB, H), jnp.float32)],   # num accumulator
        ),
        compiler_params=pltpu.CompilerParams(
            dimension_semantics=("parallel", "arbitrary"),
            vmem_limit_bytes=vmem_limit),
        cost_estimate=cost,
    )(*hiddens, mask, inv_den)


def avg_pooler(hidden_states, attention_mask, *, tile_b=None, tile_s=None):
    """hidden_states: [B, S, H]; attention_mask: [B, S] -> [B, H]."""
    return _avg_call(_avg_kernel, (hidden_states,), attention_mask,
                     scale=1.0, tile_b=tile_b, tile_s=tile_s)


def avg2_pooler(hidden_a, hidden_b, attention_mask, *, tile_b=None, tile_s=None):
    """Fused (masked_avg(a) + masked_avg(b)) / 2 for avg_top2 / avg_first_last."""
    return _avg_call(_avg2_kernel, (hidden_a, hidden_b), attention_mask,
                     scale=0.5, tile_b=tile_b, tile_s=tile_s)


# ---------------------------------------------------------------------------
# Module wrapper mirroring SimcsePooler.forward
# ---------------------------------------------------------------------------
class SimcsePoolerPallas:
    def __init__(self, pooler_type, hidden_size, key, param_dtype=jnp.float32):
        self.pooler_type = pooler_type
        self.hidden_size = hidden_size
        self.weight = None
        self.bias = None
        self._w_t = None
        self._bias2d = None
        if pooler_type == "cls":
            k_w, k_b = jax.random.split(key)
            bound = 1.0 / math.sqrt(hidden_size)
            # deterministic init mimicking nn.Linear's uniform init
            self.weight = jax.random.uniform(
                k_w, (hidden_size, hidden_size), jnp.float32, -bound, bound)
            self.bias = jax.random.uniform(
                k_b, (hidden_size,), jnp.float32, -bound, bound)
            # Pre-transpose ([out,in] -> [in,out]) and pre-cast ONCE at init.
            self._w_t = self.weight.T.astype(param_dtype)
            self._bias2d = self.bias.reshape(1, hidden_size).astype(param_dtype)

    def _cls_params(self, dtype):
        # Keep the resident weight in the activation dtype (bf16 in -> bf16 MXU).
        if self._w_t.dtype != dtype:
            self._w_t = self._w_t.astype(dtype)
            self._bias2d = self._bias2d.astype(dtype)
        return self._w_t, self._bias2d

    def __call__(self, output, attention_mask):
        # `output` mirrors the HF-style tuple: output[0] = last_hidden_state,
        # output[2] = tuple of all hidden states.
        if self.pooler_type == "cls":
            hs = output[0]
            w_t, bias2d = self._cls_params(hs.dtype)
            return cls_pooler(hs, w_t, bias2d)
        elif self.pooler_type == "cls_before_pooler":
            return output[0][:, 0, :]
        elif self.pooler_type == "avg":
            return avg_pooler(output[0], attention_mask)
        elif self.pooler_type == "avg_top2":
            return avg2_pooler(output[2][-1], output[2][-2], attention_mask)
        elif self.pooler_type == "avg_first_last":
            return avg2_pooler(output[2][-1], output[2][1], attention_mask)
        else:
            raise ValueError(self.pooler_type)


# ---------------------------------------------------------------------------
# Pure-JAX references for correctness checking
# ---------------------------------------------------------------------------
def _cls_ref(cls_vec, weight, bias):
    return jnp.tanh(cls_vec @ weight.T + bias)


def _avg_ref(h, mask):
    mask = mask.astype(h.dtype)
    return jnp.sum(h * mask[:, :, None], axis=1) / (
        jnp.sum(mask, axis=1, keepdims=True) + 1e-8)


if __name__ == "__main__":
    key = jax.random.PRNGKey(0)
    B, S, H, L = 16, 256, 128, 3   # batch, seq, hidden, num hidden layers

    k_hs, k_all, k_mask, k_params = jax.random.split(key, 4)

    last_hidden = jax.random.normal(k_hs, (B, S, H), jnp.float32)
    all_hidden = tuple(
        jax.random.normal(jax.random.fold_in(k_all, i), (B, S, H), jnp.float32)
        for i in range(L + 1))  # embeddings + L layers
    attention_mask = (
        jax.random.uniform(k_mask, (B, S)) > 0.3).astype(jnp.float32)

    # HF-style output tuple: (last_hidden_state, pooler_output, hidden_states)
    output = (last_hidden, None, all_hidden)

    # --- cls branch (fused CLS slice + Linear + Tanh) ---
    pooler_cls = SimcsePoolerPallas("cls", H, k_params)
    out_cls = jax.block_until_ready(pooler_cls(output, attention_mask))
    ref_cls = _cls_ref(last_hidden[:, 0, :], pooler_cls.weight, pooler_cls.bias)
    assert out_cls.shape == (B, H)
    assert jnp.allclose(out_cls, ref_cls, atol=1e-5, rtol=1e-5)

    # --- cls_before_pooler (pure slice, left to XLA) ---
    pooler_cbp = SimcsePoolerPallas("cls_before_pooler", H, k_params)
    out_cbp = jax.block_until_ready(pooler_cbp(output, attention_mask))
    assert jnp.allclose(out_cbp, last_hidden[:, 0, :])

    # --- avg branch (auto-tiled masked-mean kernel) ---
    pooler_avg = SimcsePoolerPallas("avg", H, k_params)
    out_avg = jax.block_until_ready(pooler_avg(output, attention_mask))
    ref_avg = _avg_ref(last_hidden, attention_mask)
    assert out_avg.shape == (B, H)
    assert jnp.allclose(out_avg, ref_avg, atol=1e-5, rtol=1e-5)

    # --- avg with forced small tiles: multi-step S reduction + 2 batch tiles ---
    out_avg_t = jax.block_until_ready(
        avg_pooler(last_hidden, attention_mask, tile_b=8, tile_s=128))
    assert jnp.allclose(out_avg_t, ref_avg, atol=1e-5, rtol=1e-5)

    # --- avg_top2 branch (fused two-layer kernel) ---
    pooler_at2 = SimcsePoolerPallas("avg_top2", H, k_params)
    out_at2 = jax.block_until_ready(pooler_at2(output, attention_mask))
    ref_at2 = (_avg_ref(all_hidden[-1], attention_mask)
               + _avg_ref(all_hidden[-2], attention_mask)) / 2.0
    assert jnp.allclose(out_at2, ref_at2, atol=1e-5, rtol=1e-5)

    # --- avg_first_last branch (fused two-layer kernel) ---
    pooler_afl = SimcsePoolerPallas("avg_first_last", H, k_params)
    out_afl = jax.block_until_ready(pooler_afl(output, attention_mask))
    ref_afl = (_avg_ref(all_hidden[-1], attention_mask)
               + _avg_ref(all_hidden[1], attention_mask)) / 2.0
    assert jnp.allclose(out_afl, ref_afl, atol=1e-5, rtol=1e-5)

    # --- bf16 activations (native-dtype mask-mul, f32 accumulation) ---
    last_bf16 = last_hidden.astype(jnp.bfloat16)
    out_bf16 = jax.block_until_ready(
        avg_pooler(last_bf16, attention_mask, tile_b=8, tile_s=128))
    ref_bf16 = _avg_ref(last_bf16.astype(jnp.float32), attention_mask)
    assert jnp.allclose(out_bf16.astype(jnp.float32), ref_bf16,
                        atol=5e-3, rtol=2e-2)

    # --- ragged shapes: B not a multiple of 8, S not a multiple of 128 ---
    Br, Sr = 12, 200
    hr = jax.random.normal(jax.random.fold_in(key, 7), (Br, Sr, H), jnp.float32)
    mr = (jax.random.uniform(jax.random.fold_in(key, 8), (Br, Sr)) > 0.3
          ).astype(jnp.float32)
    out_r = jax.block_until_ready(avg_pooler(hr, mr))
    ref_r = _avg_ref(hr, mr)
    assert out_r.shape == (Br, H)
    assert jnp.allclose(out_r, ref_r, atol=1e-5, rtol=1e-5)

    print("KERNEL_OK")
</pallas_src>

<mosaic_0001>
module attributes {stable_mosaic.version = 11 : i64} {
  func.func @_cls_kernel(%arg0: i32, %arg1: memref<8x128xf32, #tpu.memory_space<vmem>>, %arg2: memref<128x128xf32, #tpu.memory_space<vmem>>, %arg3: memref<1x128xf32, #tpu.memory_space<vmem>>, %arg4: memref<8x128xf32, #tpu.memory_space<vmem>>) attributes {dimension_semantics = [#tpu.dimension_semantics<parallel>], iteration_bounds = array<i64: 2>, scalar_prefetch = 0 : i64, scratch_operands = 0 : i64, tpu.core_type = #tpu.core_type<tc>, window_params = [{transform_indices = @transform_0, window_bounds = array<i64: 8, 128>}, {pipeline_mode = #tpu.pipeline_mode<synchronous>, transform_indices = @transform_1, window_bounds = array<i64: 128, 128>}, {pipeline_mode = #tpu.pipeline_mode<synchronous>, transform_indices = @transform_2, window_bounds = array<i64: 1, 128>}, {transform_indices = @transform_3, window_bounds = array<i64: 8, 128>}]} {
    %c0 = arith.constant 0 : index
    %c0_0 = arith.constant 0 : index
    %0 = vector.load %arg1[%c0, %c0_0] : memref<8x128xf32, #tpu.memory_space<vmem>>, vector<8x128xf32>
    %c0_1 = arith.constant 0 : index
    %c0_2 = arith.constant 0 : index
    %1 = vector.load %arg2[%c0_1, %c0_2] : memref<128x128xf32, #tpu.memory_space<vmem>>, vector<128x128xf32>
    %cst = arith.constant dense<0.000000e+00> : vector<8x128xf32>
    %2 = tpu.matmul %0, %1, %cst {dimension_numbers = #tpu.dot_dimension_numbers<[1], [0], [0], [1], [0, 0, 1, 1], [], []>} : vector<8x128xf32>, vector<128x128xf32>, vector<8x128xf32> -> vector<8x128xf32>
    %c0_3 = arith.constant 0 : index
    %c0_4 = arith.constant 0 : index
    %3 = vector.load %arg3[%c0_3, %c0_4] : memref<1x128xf32, #tpu.memory_space<vmem>>, vector<1x128xf32>
    %4 = vector.broadcast %3 : vector<1x128xf32> to vector<8x128xf32>
    %5 = arith.addf %2, %4 : vector<8x128xf32>
    %6 = math.tanh %5 : vector<8x128xf32>
    %c0_5 = arith.constant 0 : index
    %c0_6 = arith.constant 0 : index
    %7 = vector.load %arg4[%c0_5, %c0_6] : memref<8x128xf32, #tpu.memory_space<vmem>>, vector<8x128xf32>
    tpu.vector_store %arg4[%c0_5, %c0_6], %6 {strides = array<i32>} : memref<8x128xf32, #tpu.memory_space<vmem>>, vector<8x128xf32>,
    return
  }
  func.func @transform_0(%arg0: i32) -> (i32, i32) {
    %c0_i32 = arith.constant 0 : i32
    %c0_i32_0 = arith.constant 0 : i32
    return %arg0, %c0_i32 : i32, i32
  }
  func.func @transform_1(%arg0: i32) -> (i32, i32) {
    %c0_i32 = arith.constant 0 : i32
    %c0_i32_0 = arith.constant 0 : i32
    %c0_i32_1 = arith.constant 0 : i32
    return %c0_i32, %c0_i32_0 : i32, i32
  }
  func.func @transform_2(%arg0: i32) -> (i32, i32) {
    %c0_i32 = arith.constant 0 : i32
    %c0_i32_0 = arith.constant 0 : i32
    %c0_i32_1 = arith.constant 0 : i32
    return %c0_i32, %c0_i32_0 : i32, i32
  }
  func.func @transform_3(%arg0: i32) -> (i32, i32) {
    %c0_i32 = arith.constant 0 : i32
    %c0_i32_0 = arith.constant 0 : i32
    return %arg0, %c0_i32 : i32, i32
  }
}

</mosaic_0001>

<llo_original>
// kernel: tpu_custom_call.1
$region0: #{tpu_custom_call.1}
  #allocation0 [shape = 'u32[]', space=smem, size = 0x4, offset = 0x4, fixed_abs, tag = 'smem constant byte address 0x4 - core index']
  #allocation1 [shape = 'u32[144,128]{1,0:T(1,128)}', space=vmem, size = 0x12000, scoped, tag = 'internal scratch']
  %s0 = inlined_call_operand.hbm [shape: f32[16,32768], index: 0, kind: input, shape index: {}]
  %s1 = inlined_call_operand.hbm [shape: f32[128,128], index: 1, kind: input, shape index: {}]
  %s2 = inlined_call_operand.hbm [shape: f32[1,128], index: 2, kind: input, shape index: {}]
  %s3 = inlined_call_operand.hbm [shape: f32[16,128], index: 3, kind: output, shape index: {}]
  %s4 = sld [smem:[#allocation0]]
  $region57: #{tpu_custom_call.1} parent=0
    _
  %s6 = ssub.s32 1, %s4
  %s7 = scalar_select 0, %s6, %s4
  $region1: #{tpu_custom_call.1} parent=0
    #allocation2 [shape = 'u8[8192]{0}', space=vmem, size = 0x2000, scoped, tag = 'input window, operand 0']
    #allocation3 [shape = 's32[2]{0}', space=sflag, size = 0x8, scoped, tag = 'scoped memory for tpu_custom_call.1']
    #allocation4 [shape = 's32[2]{0}', space=sflag, size = 0x8, scoped, tag = 'scoped memory for tpu_custom_call.1']
    #allocation5 [shape = 'u8[65536]{0}', space=vmem, size = 0x10000, scoped, tag = 'input window, operand 1, single buffered']
    #allocation6 [shape = 's32[1]{0}', space=sflag, size = 0x4, scoped, tag = 'scoped memory for tpu_custom_call.1']
    #allocation7 [shape = 'u8[512]{0}', space=vmem, size = 0x400, scoped, tag = 'input window, operand 2, single buffered']
    #allocation8 [shape = 'u8[8192]{0}', space=vmem, size = 0x2000, scoped, tag = 'output window, operand 0']
    %8 = vsyncpa [#allocation3], 0
    %s9 = scalar_lea.sflag [#allocation3], 1
    %10 = vsyncpa %s9, 0
    %11 = vsyncpa [#allocation6], 0
    %12 = vsyncpa [#allocation4], 0
    %s13 = scalar_lea.sflag [#allocation4], 1
    %14 = vsyncpa %s13, 0
    loop: start=0, step=1, limit=4
    $region2: #{tpu_custom_call.1} parent=1 // loop_pre_header
      _
    $region3: #{tpu_custom_call.1} parent=1 // loop_header
      %s16 = sphi 0, %s20
      %p17 = scmp.ge.s32.totalorder %s16, 4
      %s26 = sphi 0, %s28
      %s29 = sphi 0, %s26
      %s30 = sphi 0, %s29
      %s46 = sphi 0, %s30
      %s50 = sphi 0, %s50
      %s52 = sphi 0, %s50
      %s53 = sphi 0, %s52
      %s67 = sphi 0, %s53
      %s71 = sphi 0, %s71
      %s73 = sphi 0, %s71
      %s74 = sphi 0, %s73
      %s88 = sphi 0, %s74
      %s94 = sphi 0, %s96
      %s97 = sphi 0, %s94
      %s98 = sphi 0, %s97
      %s114 = sphi 0, %s98
    $region4: #{tpu_custom_call.1} parent=1 // loop_header_branch
      %19 = sbr.rel (%p17) target = $region8
    $region5: #{tpu_custom_call.1} parent=1 // loop_body
      %s21 = ssub.s32 %s16, 1
      %s22 = ssub.s32 %s16, 2
      %s23 = sadd.s32 %s16, 1
      %s24 = ssub.s32 %s16, %s23
      %p25 = scmp.eq.s32.totalorder %s24, 0
      %s27 = sadd.s32 %s26, 1
      %s28 = scalar_select %p25, %s26, %s27
      %p31 = pneg %p25
      %p32 = scmp.eq.s32.totalorder %s16, 1
      %p33 = por %p31, %p32
      %p34 = scmp.ne.s32.totalorder %s26, %s29
      %p35 = scmp.eq.s32.totalorder %s16, 0
      %p36 = por %p34, %p35
      %p37 = scmp.ne.s32.totalorder %s26, %s29
      %p38 = scmp.eq.s32.totalorder %s21, 1
      %p39 = por %p37, %p38
      %p40 = scmp.ne.s32.totalorder %s29, %s30
      %p41 = scmp.eq.s32.totalorder %s21, 0
      %p42 = por %p40, %p41
      %p43 = scmp.ne.s32.totalorder %s29, %s30
      %p44 = scmp.eq.s32.totalorder %s22, 1
      %p45 = por %p43, %p44
      %p47 = scmp.ne.s32.totalorder %s30, %s46
      %p48 = scmp.eq.s32.totalorder %s22, 0
      %p49 = por %p47, %p48
      %s51 = sadd.s32 %s50, 1
      %p54 = scmp.eq.s32.totalorder %s16, 1
      %p55 = scmp.ne.s32.totalorder %s50, %s52
      %p56 = scmp.eq.s32.totalorder %s16, 0
      %p57 = por %p55, %p56
      %p58 = scmp.ne.s32.totalorder %s50, %s52
      %p59 = scmp.eq.s32.totalorder %s21, 1
      %p60 = por %p58, %p59
      %p61 = scmp.ne.s32.totalorder %s52, %s53
      %p62 = scmp.eq.s32.totalorder %s21, 0
      %p63 = por %p61, %p62
      %p64 = scmp.ne.s32.totalorder %s52, %s53
      %p65 = scmp.eq.s32.totalorder %s22, 1
      %p66 = por %p64, %p65
      %p68 = scmp.ne.s32.totalorder %s53, %s67
      %p69 = scmp.eq.s32.totalorder %s22, 0
      %p70 = por %p68, %p69
      %s72 = sadd.s32 %s71, 1
      %p75 = scmp.eq.s32.totalorder %s16, 1
      %p76 = scmp.ne.s32.totalorder %s71, %s73
      %p77 = scmp.eq.s32.totalorder %s16, 0
      %p78 = por %p76, %p77
      %p79 = scmp.ne.s32.totalorder %s71, %s73
      %p80 = scmp.eq.s32.totalorder %s21, 1
      %p81 = por %p79, %p80
      %p82 = scmp.ne.s32.totalorder %s73, %s74
      %p83 = scmp.eq.s32.totalorder %s21, 0
      %p84 = por %p82, %p83
      %p85 = scmp.ne.s32.totalorder %s73, %s74
      %p86 = scmp.eq.s32.totalorder %s22, 1
      %p87 = por %p85, %p86
      %p89 = scmp.ne.s32.totalorder %s74, %s88
      %p90 = scmp.eq.s32.totalorder %s22, 0
      %p91 = por %p89, %p90
      %s92 = ssub.s32 %s16, %s23
      %p93 = scmp.eq.s32.totalorder %s92, 0
      %s95 = sadd.s32 %s94, 1
      %s96 = scalar_select %p93, %s94, %s95
      %p99 = pneg %p93
      %p100 = scmp.eq.s32.totalorder %s16, 1
      %p101 = por %p99, %p100
      %p102 = scmp.ne.s32.totalorder %s94, %s97
      %p103 = scmp.eq.s32.totalorder %s16, 0
      %p104 = por %p102, %p103
      %p105 = scmp.ne.s32.totalorder %s94, %s97
      %p106 = scmp.eq.s32.totalorder %s21, 1
      %p107 = por %p105, %p106
      %p108 = scmp.ne.s32.totalorder %s97, %s98
      %p109 = scmp.eq.s32.totalorder %s21, 0
      %p110 = por %p108, %p109
      %p111 = scmp.ne.s32.totalorder %s97, %s98
      %p112 = scmp.eq.s32.totalorder %s22, 1
      %p113 = por %p111, %p112
      %p115 = scmp.ne.s32.totalorder %s98, %s114
      %p116 = scmp.eq.s32.totalorder %s22, 0
      %p117 = por %p115, %p116
      %p118 = scmp.le.s32.totalorder 1, %s16
      %p119 = scmp.lt.s32.totalorder %s16, 3
      %p120 = pnand %p118, %p119
      %p121 = pneg %p120
      // Predicated region
      $region9: #{tpu_custom_call.1} parent=5 // pred_check
        _
      $region10: #{tpu_custom_call.1} parent=5 // pred_check_branch
        %123 = sbr.rel (%p120) target = $region12
      $region11: #{tpu_custom_call.1} parent=5 // pred_region
        %s124 = ssub.s32 %s16, 1
        // Predicated region
        $region13: #{tpu_custom_call.1} parent=11 // pred_check
          %p125 = pneg %p63
        $region14: #{tpu_custom_call.1} parent=11 // pred_check_branch
          %127 = sbr.rel (%p125) target = $region16
        $region15: #{tpu_custom_call.1} parent=11 // pred_region
          %s129 = ssub.s32 2048, 2048
          %130 = vsyncadd [#allocation6], %s129
          %s131 = sshll.u32 [#allocation5], 4
          %s132 = int_to_ptr.vmem [resolvable:$true] %s131
          %137 = dma.hbm_to_vmem [thread:$0]  %s1, 2048, %s132, [#allocation6], 128, 128, 8
        $region16: #{tpu_custom_call.1} parent=11 // pred_fallthru
          _
        // Predicated region
        $region17: #{tpu_custom_call.1} parent=11 // pred_check
          %p138 = pneg %p84
        $region18: #{tpu_custom_call.1} parent=11 // pred_check_branch
          %140 = sbr.rel (%p138) target = $region20
        $region19: #{tpu_custom_call.1} parent=11 // pred_region
          %s142 = ssub.s32 16, 16
          %143 = vsyncadd [#allocation6], %s142
          %s145 = sshll.u32 [#allocation7], 4
          %s146 = int_to_ptr.vmem [resolvable:$true] %s145
          %148 = dma.hbm_to_vmem [thread:$0]  %s2, 16, %s146, [#allocation6]
        $region20: #{tpu_custom_call.1} parent=11 // pred_fallthru
          _
      $region12: #{tpu_custom_call.1} parent=5 // pred_fallthru
        _
      %p149 = scmp.lt.s32.totalorder %s16, 2
      // Predicated region
      $region21: #{tpu_custom_call.1} parent=5 // pred_check
        %p150 = pneg %p149
      $region22: #{tpu_custom_call.1} parent=5 // pred_check_branch
        %152 = sbr.rel (%p150) target = $region24
      $region23: #{tpu_custom_call.1} parent=5 // pred_region
        // Predicated region
        $region25: #{tpu_custom_call.1} parent=23 // pred_check
          %p153 = pneg %p36
        $region26: #{tpu_custom_call.1} parent=23 // pred_check_branch
          %155 = sbr.rel (%p153) target = $region28
        $region27: #{tpu_custom_call.1} parent=23 // pred_region
          %s156 = sand.u32 %s26, 1
          %s157 = scalar_lea.sflag [#allocation3], %s156
          %s158 = sand.u32 %s26, 1
          %s159 = smul.addr %s158, 8
          %s160 = scalar_lea.vmem [#allocation2], %s159
          %s162 = ssub.s32 128, 128
          %163 = vsyncadd %s157, %s162
          %s164 = smul.addr %s16, 256
          %s165 = smul.addr %s164, 128
          %s166 = scalar_lea.hbm %s0, %s165
          %s168 = sshll.u32 %s160, 4
          %s169 = int_to_ptr.vmem [resolvable:$true] %s168
          %171 = dma.hbm_to_vmem [thread:$0]  %s166, 128, %s169, %s157
        $region28: #{tpu_custom_call.1} parent=23 // pred_fallthru
          _
      $region24: #{tpu_custom_call.1} parent=5 // pred_fallthru
        _
      %p172 = scmp.le.s32.totalorder 1, %s16
      %p173 = scmp.lt.s32.totalorder %s16, 3
      %p174 = pnand %p172, %p173
      %p175 = pneg %p174
      // Predicated region
      $region29: #{tpu_custom_call.1} parent=5 // pred_check
        _
      $region30: #{tpu_custom_call.1} parent=5 // pred_check_branch
        %177 = sbr.rel (%p174) target = $region32
      $region31: #{tpu_custom_call.1} parent=5 // pred_region
        %s178 = ssub.s32 %s16, 1
        %s179 = sand.u32 %s29, 1
        %s180 = scalar_lea.sflag [#allocation3], %s179
        %s181 = sand.u32 %s29, 1
        %s182 = smul.addr %s181, 8
        %s183 = scalar_lea.vmem [#allocation2], %s182
        // Predicated region
        $region33: #{tpu_custom_call.1} parent=31 // pred_check
          %p184 = pneg %p42
        $region34: #{tpu_custom_call.1} parent=31 // pred_check_branch
          %186 = sbr.rel (%p184) target = $region36
        $region35: #{tpu_custom_call.1} parent=31 // pred_region
          %187 = dma.done %s180, 128
        $region36: #{tpu_custom_call.1} parent=31 // pred_fallthru
          _
        // Predicated region
        $region37: #{tpu_custom_call.1} parent=31 // pred_check
          %p188 = pneg %p63
        $region38: #{tpu_custom_call.1} parent=31 // pred_check_branch
          %190 = sbr.rel (%p188) target = $region40
        $region39: #{tpu_custom_call.1} parent=31 // pred_region
          %191 = dma.done [#allocation6], 2048
        $region40: #{tpu_custom_call.1} parent=31 // pred_fallthru
          _
        // Predicated region
        $region41: #{tpu_custom_call.1} parent=31 // pred_check
          %p192 = pneg %p84
        $region42: #{tpu_custom_call.1} parent=31 // pred_check_branch
          %194 = sbr.rel (%p192) target = $region44
        $region43: #{tpu_custom_call.1} parent=31 // pred_region
          %195 = dma.done [#allocation6], 16
        $region44: #{tpu_custom_call.1} parent=31 // pred_fallthru
          _
        %s196 = sand.u32 %s29, 1
        %s197 = scalar_lea.sflag [#allocation3], %s196
        %s198 = sand.u32 %s29, 1
        %s199 = smul.addr %s198, 8
        %s200 = scalar_lea.vmem [#allocation2], %s199
        %p201 = pneg %p42
        %p202 = pneg %p39
        %p203 = pneg %p63
        %p204 = pneg %p60
        %p205 = pneg %p84
        %p206 = pneg %p81
        %p207 = pneg %p110
        %p208 = pneg %p107
        %s209 = sand.u32 %s97, 1
        %s210 = scalar_lea.sflag [#allocation4], %s209
        %s211 = sand.u32 %s97, 1
        %s212 = smul.addr %s211, 8
        %s213 = scalar_lea.vmem [#allocation8], %s212
        %v214 = vld [vmem:[%s183] sm:$0xff]
        %v215 = vld [vmem:[#allocation5] sm:$0xff]
        %v216 = vld [vmem:[#allocation5 + $0x8] sm:$0xff]
        %v217 = vld [vmem:[#allocation5 + $0x10] sm:$0xff]
        %v218 = vld [vmem:[#allocation5 + $0x18] sm:$0xff]
        %v219 = vld [vmem:[#allocation5 + $0x20] sm:$0xff]
        %v220 = vld [vmem:[#allocation5 + $0x28] sm:$0xff]
        %v221 = vld [vmem:[#allocation5 + $0x30] sm:$0xff]
        %v222 = vld [vmem:[#allocation5 + $0x38] sm:$0xff]
        %v223 = vld [vmem:[#allocation5 + $0x40] sm:$0xff]
        %v224 = vld [vmem:[#allocation5 + $0x48] sm:$0xff]
        %v225 = vld [vmem:[#allocation5 + $0x50] sm:$0xff]
        %v226 = vld [vmem:[#allocation5 + $0x58] sm:$0xff]
        %v227 = vld [vmem:[#allocation5 + $0x60] sm:$0xff]
        %v228 = vld [vmem:[#allocation5 + $0x68] sm:$0xff]
        %v229 = vld [vmem:[#allocation5 + $0x70] sm:$0xff]
        %v230 = vld [vmem:[#allocation5 + $0x78] sm:$0xff]
        %v231 = vld [vmem:[#allocation7] sm:$0x1]
        %v233 = vlaneseq
        %v234 = vshrl.u32 %v233, 7
        %v235 = vsub.s32 0, %v234
        %v236 = vrot.slane %v231, %v235
        %238 = vmatprep.subr.mxu0 0.0
        %239 = vmatpush1.msra.mxu0 %v215
        %240 = vmatprep.subr.mxu0 0.0
        %241 = vmatpush1.msra.mxu0 %v216
        %242 = vmatprep.subr.mxu0 0.0
        %243 = vmatpush1.msra.mxu0 %v217
        %244 = vmatprep.subr.mxu0 0.0
        %245 = vmatpush1.msra.mxu0 %v218
        %246 = vmatprep.subr.mxu0 0.0
        %247 = vmatpush1.msra.mxu0 %v219
        %248 = vmatprep.subr.mxu0 0.0
        %249 = vmatpush1.msra.mxu0 %v220
        %250 = vmatprep.subr.mxu0 0.0
        %251 = vmatpush1.msra.mxu0 %v221
        %252 = vmatprep.subr.mxu0 0.0
        %253 = vmatpush1.msra.mxu0 %v222
        %254 = vmatprep.subr.mxu0 0.0
        %255 = vmatpush1.msra.mxu0 %v223
        %256 = vmatprep.subr.mxu0 0.0
        %257 = vmatpush1.msra.mxu0 %v224
        %258 = vmatprep.subr.mxu0 0.0
        %259 = vmatpush1.msra.mxu0 %v225
        %260 = vmatprep.subr.mxu0 0.0
        %261 = vmatpush1.msra.mxu0 %v226
        %262 = vmatprep.subr.mxu0 0.0
        %263 = vmatpush1.msra.mxu0 %v227
        %264 = vmatprep.subr.mxu0 0.0
        %265 = vmatpush1.msra.mxu0 %v228
        %266 = vmatprep.subr.mxu0 0.0
        %267 = vmatpush1.msra.mxu0 %v229
        %268 = vmatprep.subr.mxu0 0.0
        %269 = vmatpush1.msra.mxu0 %v230
        %270 = vmatprep.subr.mxu0 0.0
        %271 = vmatpush1.msra.mxu0 0.0
        %272 = vmatprep.subr.mxu0 0.0
        %273 = vmatpush1.msra.mxu0 0.0
        %274 = vmatprep.subr.mxu0 0.0
        %275 = vmatpush1.msra.mxu0 0.0
        %276 = vmatprep.subr.mxu0 0.0
        %277 = vmatpush1.msra.mxu0 0.0
        %278 = vmatprep.subr.mxu0 0.0
        %279 = vmatpush1.msra.mxu0 0.0
        %280 = vmatprep.subr.mxu0 0.0
        %281 = vmatpush1.msra.mxu0 0.0
        %282 = vmatprep.subr.mxu0 0.0
        %283 = vmatpush1.msra.mxu0 0.0
        %284 = vmatprep.subr.mxu0 0.0
        %285 = vmatpush1.msra.mxu0 0.0
        %286 = vmatprep.subr.mxu0 0.0
        %287 = vmatpush1.msra.mxu0 0.0
        %288 = vmatprep.subr.mxu0 0.0
        %289 = vmatpush1.msra.mxu0 0.0
        %290 = vmatprep.subr.mxu0 0.0
        %291 = vmatpush1.msra.mxu0 0.0
        %292 = vmatprep.subr.mxu0 0.0
        %293 = vmatpush1.msra.mxu0 0.0
        %294 = vmatprep.subr.mxu0 0.0
        %295 = vmatpush1.msra.mxu0 0.0
        %296 = vmatprep.subr.mxu0 0.0
        %297 = vmatpush1.msra.mxu0 0.0
        %298 = vmatprep.subr.mxu0 0.0
        %299 = vmatpush1.msra.mxu0 0.0
        %300 = vmatprep.subr.mxu0 0.0
        %301 = vmatpush1.msra.mxu0 0.0
        %302 = vmatprep.mubr.f32.mxu0 0.0
        %303 = vmatmul.mubr.f32.gmra.mrb[0].mxu0 %v214
        %v304 = vpop.f32.mrb[0].mxu0
        %v305 = vadd.f32 %v236, %v304
        %v306 = vpop.f32.mrb[0].mxu0
        %307 = vdwg.mxu0
        %v308 = vtanh.pop %v305
        %309 = vst [vmem:[%s213] sm:$0xff] %v308
        %s310 = sand.u32 %s97, 1
        %s311 = scalar_lea.sflag [#allocation4], %s310
        %s312 = sand.u32 %s97, 1
        %s313 = smul.addr %s312, 8
        %s314 = scalar_lea.vmem [#allocation8], %s313
        // Predicated region
        $region45: #{tpu_custom_call.1} parent=31 // pred_check
          %p315 = pneg %p107
        $region46: #{tpu_custom_call.1} parent=31 // pred_check_branch
          %317 = sbr.rel (%p315) target = $region48
        $region47: #{tpu_custom_call.1} parent=31 // pred_region
          %s319 = ssub.s32 128, 128
          %320 = vsyncadd %s311, %s319
          %s321 = smul.addr %s21, 128
          %s322 = scalar_lea.hbm %s3, %s321
          %s324 = sshll.u32 %s314, 4
          %s325 = int_to_ptr.vmem [resolvable:$true] %s324
          %327 = dma.vmem_to_hbm [thread:$0]  %s325, 128, %s322, %s311
        $region48: #{tpu_custom_call.1} parent=31 // pred_fallthru
          _
      $region32: #{tpu_custom_call.1} parent=5 // pred_fallthru
        _
      %p328 = scmp.le.s32.totalorder 2, %s16
      // Predicated region
      $region49: #{tpu_custom_call.1} parent=5 // pred_check
        %p329 = pneg %p328
      $region50: #{tpu_custom_call.1} parent=5 // pred_check_branch
        %331 = sbr.rel (%p329) target = $region52
      $region51: #{tpu_custom_call.1} parent=5 // pred_region
        %s332 = ssub.s32 %s16, 2
        // Predicated region
        $region53: #{tpu_custom_call.1} parent=51 // pred_check
          %p333 = pneg %p113
        $region54: #{tpu_custom_call.1} parent=51 // pred_check_branch
          %335 = sbr.rel (%p333) target = $region56
        $region55: #{tpu_custom_call.1} parent=51 // pred_region
          %s336 = sand.u32 %s98, 1
          %s337 = scalar_lea.sflag [#allocation4], %s336
          %s338 = sand.u32 %s98, 1
          %s339 = smul.addr %s338, 8
          %s340 = scalar_lea.vmem [#allocation8], %s339
          %341 = dma.done %s337, 128
        $region56: #{tpu_custom_call.1} parent=51 // pred_fallthru
          _
      $region52: #{tpu_custom_call.1} parent=5 // pred_fallthru
        _
    $region6: #{tpu_custom_call.1} parent=1 // loop_footer
      %s20 = sadd.s32 1, %s16
    $region7: #{tpu_custom_call.1} parent=1 // loop_footer_branch
      %15 = sbr.rel target = $region3
    $region8: #{tpu_custom_call.1} parent=1 // loop_exit
      _
    %342 = vsyncpa [#allocation3], 1
    %s343 = scalar_lea.sflag [#allocation3], 1
    %344 = vsyncpa %s343, 1
    %345 = vsyncpa [#allocation6], 1
    %346 = vsyncpa [#allocation4], 1
    %s347 = scalar_lea.sflag [#allocation4], 1
    %348 = vsyncpa %s347, 1

</llo_original>
